<compile_context>
chip_gen: v6e
topology: v6e:2x2x1
jax: 0.10.0
libtpu: 0.0.40
codegen_flags: <defaults>
</compile_context>

<pallas_src>
import jax
import jax.numpy as jnp
from jax import lax
from jax.experimental import pallas as pl
from jax.experimental.pallas import tpu as pltpu


# Budget for all double-buffered blocks of one pass (apply: 2 in + 2 out),
# kept under v5e's 16 MiB scoped-VMEM default (v6e/v7x have 32 MiB).
_VMEM_BLOCK_BUDGET = 12 * 1024 * 1024


def _sublane_multiple(dtype):
    return {4: 8, 2: 16, 1: 32}.get(jnp.dtype(dtype).itemsize, 8)


def _partition(n_tiles):
    """Split row tiles into P groups so the stats reduction can use both TCs."""
    p = 2 if n_tiles >= 2 else 1
    return p, pl.cdiv(n_tiles, p)


def _fold_affine(mean, var, gamma, beta, eps):
    inv = lax.rsqrt(var + eps)
    scale = gamma.astype(jnp.float32) * inv
    shift = beta.astype(jnp.float32) - mean * scale
    return scale, shift


def _batchnorm1d_2d(x2d, gamma, beta, eps, use_batch_stats,
                    running_mean, running_var, tile_rows):
    rows, C = x2d.shape
    out_dtype = x2d.dtype
    itemsize = jnp.dtype(x2d.dtype).itemsize
    sub = _sublane_multiple(x2d.dtype)

    # Lane packing: view `pack` consecutive samples as one lane-dense 128-wide
    # row (pure row-major reshape, no data movement). If rows % pack != 0 we
    # pad <= pack-1 zero rows (zeros add nothing to the sums; the extra output
    # rows are sliced off) rather than giving up lane density.
    pack = 128 // C if (0 < C <= 128 and 128 % C == 0) else 1
    pad_rows = (-rows) % pack
    if pad_rows:
        x2d = jnp.pad(x2d, ((0, pad_rows), (0, 0)))
    lane_width = C * pack
    packed_rows = (rows + pad_rows) // pack
    x_packed = x2d.reshape(packed_rows, lane_width)

    # Row tile: big blocks (default 2048x128 f32 = 1 MiB) amortize the
    # ~0.35 us per-grid-step overhead, capped by the VMEM budget.
    max_tile = max(sub, (_VMEM_BLOCK_BUDGET // (4 * lane_width * itemsize))
                   // sub * sub)
    tile_cap = min(max(tile_rows, sub), max_tile)
    if packed_rows <= tile_cap:
        tile = packed_rows                       # single block == full dim
    else:
        tile = max(sub, (tile_cap // sub) * sub)
    n_tiles = pl.cdiv(packed_rows, tile)

    if use_batch_stats:
        P, steps = _partition(n_tiles)
        ragged = (P * steps * tile) != packed_rows

        def stats_kernel(x_ref, sum_ref, sq_ref):
            @pl.when(pl.program_id(1) == 0)
            def _():
                sum_ref[...] = jnp.zeros_like(sum_ref)
                sq_ref[...] = jnp.zeros_like(sq_ref)
            x = x_ref[...].astype(jnp.float32)           # (tile, lane_width)
            if ragged:
                start = (pl.program_id(0) * steps + pl.program_id(1)) * tile
                valid = packed_rows - start
                row_ids = lax.broadcasted_iota(jnp.int32, x.shape, 0)
                x = jnp.where(row_ids < valid, x, 0.0)
            sum_ref[...] += jnp.sum(x, axis=0).reshape(sum_ref.shape)
            sq_ref[...] += jnp.sum(x * x, axis=0).reshape(sq_ref.shape)

        def x_map(p, i):
            return (jnp.minimum(p * steps + i, n_tiles - 1), 0)

        psum, psq = pl.pallas_call(
            stats_kernel,
            out_shape=(jax.ShapeDtypeStruct((P, 1, lane_width), jnp.float32),
                       jax.ShapeDtypeStruct((P, 1, lane_width), jnp.float32)),
            grid=(P, steps),
            in_specs=[pl.BlockSpec((tile, lane_width), x_map)],
            out_specs=(pl.BlockSpec((1, 1, lane_width), lambda p, i: (p, 0, 0)),
                       pl.BlockSpec((1, 1, lane_width), lambda p, i: (p, 0, 0))),
            compiler_params=pltpu.CompilerParams(
                dimension_semantics=("parallel", "arbitrary")),
            cost_estimate=pl.CostEstimate(
                flops=3 * packed_rows * lane_width, transcendentals=0,
                bytes_accessed=packed_rows * lane_width * itemsize
                               + 2 * P * lane_width * 4),
        )(x_packed)
        count = jnp.float32(rows)                      # true (unpadded) count
        ch_sum = jnp.sum(psum.reshape(P * pack, C), axis=0)
        ch_sq = jnp.sum(psq.reshape(P * pack, C), axis=0)
        mean = ch_sum / count
        var = jnp.maximum(ch_sq / count - mean * mean, 0.0)  # biased variance
    else:
        mean = running_mean.astype(jnp.float32)
        var = running_var.astype(jnp.float32)

    scale, shift = _fold_affine(mean, var, gamma, beta, eps)
    compute_dtype = jnp.bfloat16 if out_dtype == jnp.bfloat16 else jnp.float32
    scale_p = jnp.tile(scale, pack).reshape(1, lane_width).astype(compute_dtype)
    shift_p = jnp.tile(shift, pack).reshape(1, lane_width).astype(compute_dtype)

    def apply_kernel(x_ref, scale_ref, shift_ref, o_ref):
        x = x_ref[...].astype(compute_dtype)
        o_ref[...] = (x * scale_ref[...] + shift_ref[...]).astype(o_ref.dtype)

    out_packed = pl.pallas_call(
        apply_kernel,
        out_shape=jax.ShapeDtypeStruct((packed_rows, lane_width), out_dtype),
        grid=(n_tiles,),
        in_specs=[pl.BlockSpec((tile, lane_width), lambda i: (i, 0)),
                  pl.BlockSpec((1, lane_width), lambda i: (0, 0)),
                  pl.BlockSpec((1, lane_width), lambda i: (0, 0))],
        out_specs=pl.BlockSpec((tile, lane_width), lambda i: (i, 0)),
        compiler_params=pltpu.CompilerParams(
            dimension_semantics=("parallel",)),          # dual-TC on v7x
        cost_estimate=pl.CostEstimate(
            flops=2 * packed_rows * lane_width, transcendentals=0,
            bytes_accessed=2 * packed_rows * lane_width * itemsize),
    )(x_packed, scale_p, shift_p)

    out2d = out_packed.reshape(rows + pad_rows, C)
    if pad_rows:
        out2d = out2d[:rows]
    return out2d


def _batchnorm1d_3d(x, gamma, beta, eps, use_batch_stats,
                    running_mean, running_var, tile_rows):
    N, C, L = x.shape
    out_dtype = x.dtype
    itemsize = jnp.dtype(x.dtype).itemsize

    # Native (N, C, L) tiling over the batch axis only — no wrapper transposes.
    # C and L stay full dims so the (8, 128) constraint is trivially satisfied.
    # TODO(synk): a single-sample slab (C*L) larger than the VMEM budget would
    # need an extra L-tiling grid axis; not required at these sizes.
    sample_bytes = max(C * L * itemsize, 1)
    target_bytes = max(tile_rows, 8) * 128 * itemsize
    budget = min(target_bytes, _VMEM_BLOCK_BUDGET // 4)
    tile_n = int(max(1, min(N, budget // sample_bytes)))
    n_tiles = pl.cdiv(N, tile_n)

    if use_batch_stats:
        P, steps = _partition(n_tiles)
        ragged = (P * steps * tile_n) != N

        def stats_kernel(x_ref, sum_ref, sq_ref):
            @pl.when(pl.program_id(1) == 0)
            def _():
                sum_ref[...] = jnp.zeros_like(sum_ref)
                sq_ref[...] = jnp.zeros_like(sq_ref)
            x = x_ref[...].astype(jnp.float32)           # (tile_n, C, L)
            if ragged:
                start = (pl.program_id(0) * steps + pl.program_id(1)) * tile_n
                valid = N - start
                ids = lax.broadcasted_iota(jnp.int32, x.shape, 0)
                x = jnp.where(ids < valid, x, 0.0)
            sum_ref[...] += jnp.sum(jnp.sum(x, axis=2),
                                    axis=0).reshape(sum_ref.shape)
            sq_ref[...] += jnp.sum(jnp.sum(x * x, axis=2),
                                   axis=0).reshape(sq_ref.shape)

        def x_map(p, i):
            return (jnp.minimum(p * steps + i, n_tiles - 1), 0, 0)

        psum, psq = pl.pallas_call(
            stats_kernel,
            out_shape=(jax.ShapeDtypeStruct((P, 1, C), jnp.float32),
                       jax.ShapeDtypeStruct((P, 1, C), jnp.float32)),
            grid=(P, steps),
            in_specs=[pl.BlockSpec((tile_n, C, L), x_map)],
            out_specs=(pl.BlockSpec((1, 1, C), lambda p, i: (p, 0, 0)),
                       pl.BlockSpec((1, 1, C), lambda p, i: (p, 0, 0))),
            compiler_params=pltpu.CompilerParams(
                dimension_semantics=("parallel", "arbitrary")),
            cost_estimate=pl.CostEstimate(
                flops=3 * N * C * L, transcendentals=0,
                bytes_accessed=N * C * L * itemsize + 2 * P * C * 4),
        )(x)
        count = jnp.float32(N * L)
        mean = jnp.sum(psum.reshape(P, C), axis=0) / count
        var = jnp.maximum(jnp.sum(psq.reshape(P, C), axis=0) / count
                          - mean * mean, 0.0)
    else:
        mean = running_mean.astype(jnp.float32)
        var = running_var.astype(jnp.float32)

    scale, shift = _fold_affine(mean, var, gamma, beta, eps)
    compute_dtype = jnp.bfloat16 if out_dtype == jnp.bfloat16 else jnp.float32
    scale_b = scale.reshape(1, C, 1).astype(compute_dtype)
    shift_b = shift.reshape(1, C, 1).astype(compute_dtype)

    def apply_kernel(x_ref, scale_ref, shift_ref, o_ref):
        x = x_ref[...].astype(compute_dtype)
        o_ref[...] = (x * scale_ref[...] + shift_ref[...]).astype(o_ref.dtype)

    return pl.pallas_call(
        apply_kernel,
        out_shape=jax.ShapeDtypeStruct((N, C, L), out_dtype),
        grid=(n_tiles,),
        in_specs=[pl.BlockSpec((tile_n, C, L), lambda i: (i, 0, 0)),
                  pl.BlockSpec((1, C, 1), lambda i: (0, 0, 0)),
                  pl.BlockSpec((1, C, 1), lambda i: (0, 0, 0))],
        out_specs=pl.BlockSpec((tile_n, C, L), lambda i: (i, 0, 0)),
        compiler_params=pltpu.CompilerParams(
            dimension_semantics=("parallel",)),
        cost_estimate=pl.CostEstimate(
            flops=2 * N * C * L, transcendentals=0,
            bytes_accessed=2 * N * C * L * itemsize),
    )(x, scale_b, shift_b)


def batchnorm1d(x, gamma, beta, *, eps=1e-5, training=True,
                running_mean=None, running_var=None, tile_rows=2048):
    """Forward of nn.BatchNorm1d(inSize) for x of shape (N, C) or (N, C, L)."""
    # TODO(synk): running_mean / running_var / num_batches_tracked buffer
    # updates (training-mode module state) are not produced; forward-output only.
    use_batch_stats = training or running_mean is None or running_var is None
    if x.ndim == 2:
        return _batchnorm1d_2d(x, gamma, beta, eps, use_batch_stats,
                               running_mean, running_var, tile_rows)
    if x.ndim == 3:
        return _batchnorm1d_3d(x, gamma, beta, eps, use_batch_stats,
                               running_mean, running_var, tile_rows)
    raise ValueError("expected 2D (N, C) or 3D (N, C, L) input")


if __name__ == "__main__":
    eps = 1e-5
    key = jax.random.PRNGKey(0)
    k2d, k3d, kg, kb, kr = jax.random.split(key, 5)

    in_size = 32
    gamma = 1.0 + 0.1 * jax.random.normal(kg, (in_size,), dtype=jnp.float32)
    beta = 0.1 * jax.random.normal(kb, (in_size,), dtype=jnp.float32)

    def ref_bn2d(x):
        m = jnp.mean(x, axis=0)
        v = jnp.mean((x - m) ** 2, axis=0)
        return (x - m) * lax.rsqrt(v + eps) * gamma + beta

    def ref_bn3d(x):
        m = jnp.mean(x, axis=(0, 2), keepdims=True)
        v = jnp.mean((x - m) ** 2, axis=(0, 2), keepdims=True)
        return ((x - m) * lax.rsqrt(v + eps)
                * gamma[None, :, None] + beta[None, :, None])

    # --- 2D input: (batch, features) ---
    x2 = jax.random.normal(k2d, (64, in_size), dtype=jnp.float32)
    y2 = batchnorm1d(x2, gamma, beta, eps=eps, training=True)
    jax.block_until_ready(y2)
    assert y2.shape == x2.shape
    assert jnp.max(jnp.abs(y2 - ref_bn2d(x2))) < 1e-3

    # --- 2D ragged rows, small forced tile: exercises lane-pack padding,
    #     multi-tile grid, megacore stats partition and edge-block masking ---
    x2r = jax.random.normal(kr, (70, in_size), dtype=jnp.float32)
    y2r = batchnorm1d(x2r, gamma, beta, eps=eps, training=True, tile_rows=8)
    jax.block_until_ready(y2r)
    assert y2r.shape == x2r.shape
    assert jnp.max(jnp.abs(y2r - ref_bn2d(x2r))) < 1e-3

    # --- 3D input: (batch, channels, length), native layout (no transposes) ---
    x3 = jax.random.normal(k3d, (4, in_size, 8), dtype=jnp.float32)
    y3 = batchnorm1d(x3, gamma, beta, eps=eps, training=True)
    jax.block_until_ready(y3)
    assert y3.shape == x3.shape
    assert jnp.max(jnp.abs(y3 - ref_bn3d(x3))) < 1e-3

    # --- 3D ragged batch with a multi-tile grid ---
    x3r = jax.random.normal(kr, (5, in_size, 8), dtype=jnp.float32)
    y3r = batchnorm1d(x3r, gamma, beta, eps=eps, training=True, tile_rows=8)
    jax.block_until_ready(y3r)
    assert y3r.shape == x3r.shape
    assert jnp.max(jnp.abs(y3r - ref_bn3d(x3r))) < 1e-3

    print("KERNEL_OK")
</pallas_src>

<mosaic_0001>
module attributes {stable_mosaic.version = 11 : i64} {
  func.func @stats_kernel(%arg0: i32, %arg1: i32, %arg2: memref<16x128xf32, #tpu.memory_space<vmem>>, %arg3: memref<1x1x128xf32, #tpu.memory_space<vmem>>, %arg4: memref<1x1x128xf32, #tpu.memory_space<vmem>>) attributes {dimension_semantics = [#tpu.dimension_semantics<parallel>, #tpu.dimension_semantics<arbitrary>], iteration_bounds = array<i64: 1, 1>, scalar_prefetch = 0 : i64, scratch_operands = 0 : i64, tpu.core_type = #tpu.core_type<tc>, window_params = [{transform_indices = @transform_0, window_bounds = array<i64: 16, 128>}, {transform_indices = @transform_1, window_bounds = array<i64: 1, 1, 128>}, {transform_indices = @transform_2, window_bounds = array<i64: 1, 1, 128>}]} {
    %c0_i32 = arith.constant 0 : i32
    %0 = arith.cmpi eq, %arg1, %c0_i32 : i32
    %1 = arith.extui %0 : i1 to i32
    %c0_i32_0 = arith.constant 0 : i32
    %2 = arith.cmpi ne, %1, %c0_i32_0 : i32
    scf.if %2 {
      %cst_15 = arith.constant 0.000000e+00 : f32
      %15 = vector.broadcast %cst_15 : f32 to vector<1x1x128xf32>
      %c0_16 = arith.constant 0 : index
      %c0_17 = arith.constant 0 : index
      %c0_18 = arith.constant 0 : index
      %16 = vector.load %arg3[%c0_16, %c0_17, %c0_18] : memref<1x1x128xf32, #tpu.memory_space<vmem>>, vector<1x1x128xf32>
      tpu.vector_store %arg3[%c0_16, %c0_17, %c0_18], %15 {strides = array<i32>} : memref<1x1x128xf32, #tpu.memory_space<vmem>>, vector<1x1x128xf32>,
      %cst_19 = arith.constant 0.000000e+00 : f32
      %17 = vector.broadcast %cst_19 : f32 to vector<1x1x128xf32>
      %c0_20 = arith.constant 0 : index
      %c0_21 = arith.constant 0 : index
      %c0_22 = arith.constant 0 : index
      %18 = vector.load %arg4[%c0_20, %c0_21, %c0_22] : memref<1x1x128xf32, #tpu.memory_space<vmem>>, vector<1x1x128xf32>
      tpu.vector_store %arg4[%c0_20, %c0_21, %c0_22], %17 {strides = array<i32>} : memref<1x1x128xf32, #tpu.memory_space<vmem>>, vector<1x1x128xf32>,
    } else {
    }
    %c0 = arith.constant 0 : index
    %c0_1 = arith.constant 0 : index
    %3 = vector.load %arg2[%c0, %c0_1] : memref<16x128xf32, #tpu.memory_space<vmem>>, vector<16x128xf32>
    %c0_2 = arith.constant 0 : index
    %c0_3 = arith.constant 0 : index
    %c0_4 = arith.constant 0 : index
    %4 = vector.load %arg3[%c0_2, %c0_3, %c0_4] : memref<1x1x128xf32, #tpu.memory_space<vmem>>, vector<1x1x128xf32>
    %cst = arith.constant dense<0.000000e+00> : vector<128xf32>
    %5 = vector.multi_reduction <add>, %3, %cst [0] : vector<16x128xf32> to vector<128xf32>
    %6 = vector.shape_cast %5 : vector<128xf32> to vector<1x1x128xf32>
    %7 = arith.addf %4, %6 : vector<1x1x128xf32>
    %c0_5 = arith.constant 0 : index
    %c0_6 = arith.constant 0 : index
    %c0_7 = arith.constant 0 : index
    %8 = vector.load %arg3[%c0_5, %c0_6, %c0_7] : memref<1x1x128xf32, #tpu.memory_space<vmem>>, vector<1x1x128xf32>
    tpu.vector_store %arg3[%c0_5, %c0_6, %c0_7], %7 {strides = array<i32>} : memref<1x1x128xf32, #tpu.memory_space<vmem>>, vector<1x1x128xf32>,
    %c0_8 = arith.constant 0 : index
    %c0_9 = arith.constant 0 : index
    %c0_10 = arith.constant 0 : index
    %9 = vector.load %arg4[%c0_8, %c0_9, %c0_10] : memref<1x1x128xf32, #tpu.memory_space<vmem>>, vector<1x1x128xf32>
    %10 = arith.mulf %3, %3 : vector<16x128xf32>
    %cst_11 = arith.constant dense<0.000000e+00> : vector<128xf32>
    %11 = vector.multi_reduction <add>, %10, %cst_11 [0] : vector<16x128xf32> to vector<128xf32>
    %12 = vector.shape_cast %11 : vector<128xf32> to vector<1x1x128xf32>
    %13 = arith.addf %9, %12 : vector<1x1x128xf32>
    %c0_12 = arith.constant 0 : index
    %c0_13 = arith.constant 0 : index
    %c0_14 = arith.constant 0 : index
    %14 = vector.load %arg4[%c0_12, %c0_13, %c0_14] : memref<1x1x128xf32, #tpu.memory_space<vmem>>, vector<1x1x128xf32>
    tpu.vector_store %arg4[%c0_12, %c0_13, %c0_14], %13 {strides = array<i32>} : memref<1x1x128xf32, #tpu.memory_space<vmem>>, vector<1x1x128xf32>,
    return
  }
  func.func @transform_0(%arg0: i32, %arg1: i32) -> (i32, i32) {
    %c1_i32 = arith.constant 1 : i32
    %0 = arith.muli %arg0, %c1_i32 : i32
    %1 = arith.addi %0, %arg1 : i32
    %c0_i32 = arith.constant 0 : i32
    %2 = arith.minsi %1, %c0_i32 : i32
    %c0_i32_0 = arith.constant 0 : i32
    %c0_i32_1 = arith.constant 0 : i32
    return %2, %c0_i32_0 : i32, i32
  }
  func.func @transform_1(%arg0: i32, %arg1: i32) -> (i32, i32, i32) {
    %c0_i32 = arith.constant 0 : i32
    %c0_i32_0 = arith.constant 0 : i32
    %c0_i32_1 = arith.constant 0 : i32
    return %arg0, %c0_i32, %c0_i32_0 : i32, i32, i32
  }
  func.func @transform_2(%arg0: i32, %arg1: i32) -> (i32, i32, i32) {
    %c0_i32 = arith.constant 0 : i32
    %c0_i32_0 = arith.constant 0 : i32
    %c0_i32_1 = arith.constant 0 : i32
    return %arg0, %c0_i32, %c0_i32_0 : i32, i32, i32
  }
}

</mosaic_0001>

<llo_original>
// kernel: tpu_custom_call.1
$region0: #{tpu_custom_call.1}
  #allocation0 [shape = 'u32[]', space=smem, size = 0x4, offset = 0x4, fixed_abs, tag = 'smem constant byte address 0x4 - core index']
  #allocation1 [shape = 'u32[144,128]{1,0:T(1,128)}', space=vmem, size = 0x12000, scoped, tag = 'internal scratch']
  %s0 = inlined_call_operand.hbm [shape: f32[16,128], index: 0, kind: input, shape index: {}]
  %s1 = inlined_call_operand.hbm [shape: f32[1,1,128], index: 1, kind: output, shape index: {0}]
  %s2 = inlined_call_operand.hbm [shape: f32[1,1,128], index: 2, kind: output, shape index: {1}]
  %3 = xla_tuple %s1, %s2
  %s4 = sld [smem:[#allocation0]]
  $region30: #{tpu_custom_call.1} parent=0
    _
  %s6 = ssub.s32 1, %s4
  %s7 = scalar_select 0, %s6, %s4
  $region1: #{tpu_custom_call.1} parent=0
    #allocation2 [shape = 'u8[8192]{0}', space=vmem, size = 0x2000, scoped, tag = 'input window, operand 0, single buffered']
    #allocation3 [shape = 's32[1]{0}', space=sflag, size = 0x4, scoped, tag = 'scoped memory for tpu_custom_call.1']
    #allocation4 [shape = 's32[1]{0}', space=sflag, size = 0x4, scoped, tag = 'scoped memory for tpu_custom_call.1']
    #allocation5 [shape = 'u8[512]{0}', space=vmem, size = 0x400, scoped, tag = 'output window, operand 0, single buffered']
    #allocation6 [shape = 'u8[512]{0}', space=vmem, size = 0x400, scoped, tag = 'output window, operand 1, single buffered']
    #allocation7 [shape = 's32[1]{0}', space=sflag, size = 0x4, scoped, tag = 'scoped memory for tpu_custom_call.1']
    %8 = vsyncpa [#allocation3], 0
    %9 = vsyncpa [#allocation4], 0
    %10 = vsyncpa [#allocation7], 0
    // Predicated region
    $region2: #{tpu_custom_call.1} parent=1 // pred_check
      _
    $region3: #{tpu_custom_call.1} parent=1 // pred_check_branch
      %12 = sbr.rel (0) target = $region5
    $region4: #{tpu_custom_call.1} parent=1 // pred_region
      %s13 = sadd.s32 0, 0
      %p14 = scmp.lt.s32.totalorder %s13, 0
      %s15 = scalar_select %p14, %s13, 0
      %s16 = smul.u32 2, %s15
      %s18 = ssub.s32 256, 256
      %19 = vsyncadd [#allocation3], %s18
      %s20 = smul.addr %s16, 128
      %s21 = scalar_lea.hbm %s0, %s20
      %s22 = sshll.u32 [#allocation2], 4
      %s23 = int_to_ptr.vmem [resolvable:$true] %s22
      %28 = dma.hbm_to_vmem [thread:$0]  %s21, 256, %s23, [#allocation3], 128, 128, 8
    $region5: #{tpu_custom_call.1} parent=1 // pred_fallthru
      _
    // Predicated region
    $region6: #{tpu_custom_call.1} parent=1 // pred_check
      _
    $region7: #{tpu_custom_call.1} parent=1 // pred_check_branch
      %30 = sbr.rel (0) target = $region9
    $region8: #{tpu_custom_call.1} parent=1 // pred_region
      %31 = dma.done [#allocation3], 256
    $region9: #{tpu_custom_call.1} parent=1 // pred_fallthru
      _
    %s32 = sadd.s32 0, 0
    %p33 = scmp.lt.s32.totalorder %s32, 0
    %s34 = scalar_select %p33, %s32, 0
    %s35 = smul.u32 2, %s34
    %p36 = scmp.eq.s32.totalorder 0, 0
    // Predicated region
    $region10: #{tpu_custom_call.1} parent=1 // pred_check
      %p37 = pneg %p36
    $region11: #{tpu_custom_call.1} parent=1 // pred_check_branch
      %39 = sbr.rel (%p37) target = $region13
    $region12: #{tpu_custom_call.1} parent=1 // pred_region
      %40 = vst [vmem:[#allocation5] sm:$0x1] 0.0
      %41 = vst [vmem:[#allocation6] sm:$0x1] 0.0
    $region13: #{tpu_custom_call.1} parent=1 // pred_fallthru
      _
    %v42 = vld [vmem:[#allocation2] sm:$0xff]
    %v43 = vld [vmem:[#allocation2 + $0x8] sm:$0xff]
    %v44 = vld [vmem:[#allocation5] sm:$0x1]
    %v45 = vadd.f32 %v42, %v43
    %v46 = vrot.slane %v45, 4
    %v47 = vadd.f32 %v45, %v46
    %v48 = vrot.slane %v47, 2
    %v49 = vadd.f32 %v47, %v48
    %v50 = vrot.slane %v49, 1
    %v51 = vadd.f32 %v49, %v50
    %v52 = vadd.f32 %v44, %v51
    %53 = vst [vmem:[#allocation5] sm:$0x1] %v52
    %v54 = vld [vmem:[#allocation6] sm:$0x1]
    %v55 = vmul.f32 %v42, %v42
    %v56 = vmul.f32 %v43, %v43
    %v57 = vadd.f32 %v55, %v56
    %v58 = vrot.slane %v57, 4
    %v59 = vadd.f32 %v57, %v58
    %v60 = vrot.slane %v59, 2
    %v61 = vadd.f32 %v59, %v60
    %v62 = vrot.slane %v61, 1
    %v63 = vadd.f32 %v61, %v62
    %v64 = vadd.f32 %v54, %v63
    %65 = vst [vmem:[#allocation6] sm:$0x1] %v64
    // Predicated region
    $region14: #{tpu_custom_call.1} parent=1 // pred_check
      _
    $region15: #{tpu_custom_call.1} parent=1 // pred_check_branch
      %67 = sbr.rel (0) target = $region17
    $region16: #{tpu_custom_call.1} parent=1 // pred_region
      %s69 = ssub.s32 16, 16
      %70 = vsyncadd [#allocation4], %s69
      %s72 = sshll.u32 [#allocation5], 4
      %s73 = int_to_ptr.vmem [resolvable:$true] %s72
      %75 = dma.vmem_to_hbm [thread:$0]  %s73, 16, %s1, [#allocation4]
    $region17: #{tpu_custom_call.1} parent=1 // pred_fallthru
      _
    // Predicated region
    $region18: #{tpu_custom_call.1} parent=1 // pred_check
      _
    $region19: #{tpu_custom_call.1} parent=1 // pred_check_branch
      %77 = sbr.rel (0) target = $region21
    $region20: #{tpu_custom_call.1} parent=1 // pred_region
      %s79 = ssub.s32 16, 16
      %80 = vsyncadd [#allocation7], %s79
      %s82 = sshll.u32 [#allocation6], 4
      %s83 = int_to_ptr.vmem [resolvable:$true] %s82
      %85 = dma.vmem_to_hbm [thread:$0]  %s83, 16, %s2, [#allocation7]
    $region21: #{tpu_custom_call.1} parent=1 // pred_fallthru
      _
    // Predicated region
    $region22: #{tpu_custom_call.1} parent=1 // pred_check
      _
    $region23: #{tpu_custom_call.1} parent=1 // pred_check_branch
      %87 = sbr.rel (0) target = $region25
    $region24: #{tpu_custom_call.1} parent=1 // pred_region
      %88 = dma.done [#allocation4], 16
    $region25: #{tpu_custom_call.1} parent=1 // pred_fallthru
      _
    // Predicated region
    $region26: #{tpu_custom_call.1} parent=1 // pred_check
      _
    $region27: #{tpu_custom_call.1} parent=1 // pred_check_branch
      %90 = sbr.rel (0) target = $region29
    $region28: #{tpu_custom_call.1} parent=1 // pred_region
      %91 = dma.done [#allocation7], 16
    $region29: #{tpu_custom_call.1} parent=1 // pred_fallthru
      _
    %92 = vsyncpa [#allocation3], 1
    %93 = vsyncpa [#allocation4], 1
    %94 = vsyncpa [#allocation7], 1

</llo_original>
